<compile_context>
chip_gen: v6e
topology: v6e:2x2x1
jax: 0.10.0
libtpu: 0.0.40
codegen_flags: <defaults>
</compile_context>

<pallas_src>
import jax
import jax.numpy as jnp
from jax.experimental import pallas as pl
from jax.experimental.pallas import tpu as pltpu

INPUTS = 1000
OUTPUTS = 5
N_PAD = 128      # OUTPUTS padded to a full lane width (lane-dense stores)
NEG_BIG = -1.0e30


def mockmodel_kernel(x_ref, w_ref, b_ref, o_ref):
    # x_ref: [TB, INPUTS], w_ref: [INPUTS, N_PAD], b_ref: [1, N_PAD],
    # o_ref: [TB, N_PAD]
    # Padded bias columns are pre-set to NEG_BIG, so logits in padded columns
    # are already masked after the bias add (w padded columns are zero).
    logits = jnp.dot(x_ref[...], w_ref[...],
                     preferred_element_type=jnp.float32) + b_ref[...]
    # Numerically stable log-softmax over the last axis (f32).
    m = jnp.max(logits, axis=-1, keepdims=True)
    shifted = logits - m
    lse = jnp.log(jnp.sum(jnp.exp(shifted), axis=-1, keepdims=True))
    o_ref[...] = (shifted - lse).astype(o_ref.dtype)


def _round_up(v, m):
    return ((v + m - 1) // m) * m


def mockmodel_forward(x, w, b, *, use_bf16_matmul=False):
    """x: [B, INPUTS]; w: [OUTPUTS, INPUTS] (PyTorch layout); b: [OUTPUTS]."""
    B = x.shape[0]
    out_dtype = x.dtype

    if use_bf16_matmul:
        # TODO(synk): optional ~2x HBM-read saving on v6e/v7x; flagged to the
        # model owner because it changes matmul input precision (acc stays f32).
        x = x.astype(jnp.bfloat16)
        w = w.astype(jnp.bfloat16)

    # Weight transposed into a lane-dense [INPUTS, N_PAD] slab (K unpadded);
    # padded output columns are zero.  Bias padded columns carry the mask.
    w_t = jnp.zeros((INPUTS, N_PAD), dtype=w.dtype)
    w_t = w_t.at[:, :OUTPUTS].set(w.T)
    b_p = jnp.full((1, N_PAD), NEG_BIG, dtype=jnp.float32)
    b_p = b_p.at[0, :OUTPUTS].set(b.reshape(-1).astype(jnp.float32))

    # Batch tiling:
    #   tiny B      -> one tile (full-dim exemption from the 8-row rule)
    #   mid-size B  -> >= 2 tiles so v7x's two TCs both get work
    #   large B     -> 1024-row tiles (fits default scoped VMEM everywhere)
    sub = 16 if x.dtype == jnp.bfloat16 else 8
    if B < 128:
        TB = B
    elif B <= 2048:
        TB = _round_up(pl.cdiv(B, 2), sub)
    else:
        TB = 1024
    grid = (pl.cdiv(B, TB),)

    x_itemsize = jnp.dtype(x.dtype).itemsize
    o_itemsize = jnp.dtype(out_dtype).itemsize
    cost = pl.CostEstimate(
        flops=2 * B * INPUTS * OUTPUTS,
        bytes_accessed=(B * INPUTS * x_itemsize            # x read
                        + INPUTS * N_PAD * x_itemsize      # weight read
                        + N_PAD * 4                        # bias read
                        + B * N_PAD * o_itemsize),         # output write
        transcendentals=B * (N_PAD + 1),
    )

    out_padded = pl.pallas_call(
        mockmodel_kernel,
        out_shape=jax.ShapeDtypeStruct((B, N_PAD), out_dtype),
        grid=grid,
        in_specs=[
            pl.BlockSpec((TB, INPUTS), lambda i: (i, 0)),    # x tile (no pad copy)
            pl.BlockSpec((INPUTS, N_PAD), lambda i: (0, 0)),  # weight (resident)
            pl.BlockSpec((1, N_PAD), lambda i: (0, 0)),       # bias (resident)
        ],
        out_specs=pl.BlockSpec((TB, N_PAD), lambda i: (i, 0)),
        compiler_params=pltpu.CompilerParams(
            dimension_semantics=("parallel",)),
        cost_estimate=cost,
    )(x, w_t, b_p)

    return out_padded[:, :OUTPUTS]


if __name__ == "__main__":
    key = jax.random.PRNGKey(0)
    k_x, k_w, k_b = jax.random.split(key, 3)

    B = 8  # small batch
    x = jax.random.normal(k_x, (B, INPUTS), dtype=jnp.float32)

    # Deterministic init mimicking nn.Linear uniform(-1/sqrt(fan_in), 1/sqrt(fan_in))
    bound = 1.0 / (INPUTS ** 0.5)
    w = jax.random.uniform(k_w, (OUTPUTS, INPUTS), minval=-bound, maxval=bound,
                           dtype=jnp.float32)   # PyTorch layout [out, in]
    b = jax.random.uniform(k_b, (OUTPUTS,), minval=-bound, maxval=bound,
                           dtype=jnp.float32)

    out = mockmodel_forward(x, w, b)
    out = jax.block_until_ready(out)

    # Reference in plain JAX.
    logits_ref = x @ w.T + b
    ref = jax.nn.log_softmax(logits_ref, axis=1)

    assert out.shape == (B, OUTPUTS)
    assert jnp.allclose(out, ref, atol=1e-5, rtol=1e-5)

    print("KERNEL_OK")
</pallas_src>

<mosaic_0001>
module attributes {stable_mosaic.version = 11 : i64} {
  func.func @mockmodel_kernel(%arg0: i32, %arg1: memref<8x1000xf32, #tpu.memory_space<vmem>>, %arg2: memref<1000x128xf32, #tpu.memory_space<vmem>>, %arg3: memref<1x128xf32, #tpu.memory_space<vmem>>, %arg4: memref<8x128xf32, #tpu.memory_space<vmem>>) attributes {dimension_semantics = [#tpu.dimension_semantics<parallel>], iteration_bounds = array<i64: 1>, scalar_prefetch = 0 : i64, scratch_operands = 0 : i64, tpu.core_type = #tpu.core_type<tc>, window_params = [{transform_indices = @transform_0, window_bounds = array<i64: 8, 1000>}, {pipeline_mode = #tpu.pipeline_mode<synchronous>, transform_indices = @transform_1, window_bounds = array<i64: 1000, 128>}, {pipeline_mode = #tpu.pipeline_mode<synchronous>, transform_indices = @transform_2, window_bounds = array<i64: 1, 128>}, {transform_indices = @transform_3, window_bounds = array<i64: 8, 128>}]} {
    %c0 = arith.constant 0 : index
    %c0_0 = arith.constant 0 : index
    %0 = vector.load %arg1[%c0, %c0_0] : memref<8x1000xf32, #tpu.memory_space<vmem>>, vector<8x1000xf32>
    %c0_1 = arith.constant 0 : index
    %c0_2 = arith.constant 0 : index
    %1 = vector.load %arg2[%c0_1, %c0_2] : memref<1000x128xf32, #tpu.memory_space<vmem>>, vector<1000x128xf32>
    %cst = arith.constant dense<0.000000e+00> : vector<8x128xf32>
    %2 = tpu.matmul %0, %1, %cst {dimension_numbers = #tpu.dot_dimension_numbers<[1], [0], [0], [1], [0, 0, 1, 1], [], []>} : vector<8x1000xf32>, vector<1000x128xf32>, vector<8x128xf32> -> vector<8x128xf32>
    %c0_3 = arith.constant 0 : index
    %c0_4 = arith.constant 0 : index
    %3 = vector.load %arg3[%c0_3, %c0_4] : memref<1x128xf32, #tpu.memory_space<vmem>>, vector<1x128xf32>
    %4 = vector.broadcast %3 : vector<1x128xf32> to vector<8x128xf32>
    %5 = arith.addf %2, %4 : vector<8x128xf32>
    %cst_5 = arith.constant dense<0xFF800000> : vector<8xf32>
    %6 = vector.multi_reduction <maximumf>, %5, %cst_5 [1] : vector<8x128xf32> to vector<8xf32>
    %7 = vector.shape_cast %6 : vector<8xf32> to vector<8x1xf32>
    %8 = vector.broadcast %7 : vector<8x1xf32> to vector<8x128xf32>
    %9 = arith.subf %5, %8 : vector<8x128xf32>
    %10 = math.exp %9 : vector<8x128xf32>
    %cst_6 = arith.constant dense<0.000000e+00> : vector<8xf32>
    %11 = vector.multi_reduction <add>, %10, %cst_6 [1] : vector<8x128xf32> to vector<8xf32>
    %12 = vector.shape_cast %11 : vector<8xf32> to vector<8x1xf32>
    %13 = math.log %12 : vector<8x1xf32>
    %14 = vector.broadcast %13 : vector<8x1xf32> to vector<8x128xf32>
    %15 = arith.subf %9, %14 : vector<8x128xf32>
    %c0_7 = arith.constant 0 : index
    %c0_8 = arith.constant 0 : index
    %16 = vector.load %arg4[%c0_7, %c0_8] : memref<8x128xf32, #tpu.memory_space<vmem>>, vector<8x128xf32>
    tpu.vector_store %arg4[%c0_7, %c0_8], %15 {strides = array<i32>} : memref<8x128xf32, #tpu.memory_space<vmem>>, vector<8x128xf32>,
    return
  }
  func.func @transform_0(%arg0: i32) -> (i32, i32) {
    %c0_i32 = arith.constant 0 : i32
    %c0_i32_0 = arith.constant 0 : i32
    return %arg0, %c0_i32 : i32, i32
  }
  func.func @transform_1(%arg0: i32) -> (i32, i32) {
    %c0_i32 = arith.constant 0 : i32
    %c0_i32_0 = arith.constant 0 : i32
    %c0_i32_1 = arith.constant 0 : i32
    return %c0_i32, %c0_i32_0 : i32, i32
  }
  func.func @transform_2(%arg0: i32) -> (i32, i32) {
    %c0_i32 = arith.constant 0 : i32
    %c0_i32_0 = arith.constant 0 : i32
    %c0_i32_1 = arith.constant 0 : i32
    return %c0_i32, %c0_i32_0 : i32, i32
  }
  func.func @transform_3(%arg0: i32) -> (i32, i32) {
    %c0_i32 = arith.constant 0 : i32
    %c0_i32_0 = arith.constant 0 : i32
    return %arg0, %c0_i32 : i32, i32
  }
}

</mosaic_0001>

<llo_original>
// kernel: tpu_custom_call.1
$region0: #{tpu_custom_call.1}
  #allocation0 [shape = 'u32[]', space=smem, size = 0x4, offset = 0x4, fixed_abs, tag = 'smem constant byte address 0x4 - core index']
  #allocation1 [shape = 'u32[144,128]{1,0:T(1,128)}', space=vmem, size = 0x12000, scoped, tag = 'internal scratch']
  %s0 = inlined_call_operand.hbm [shape: f32[8,1000], index: 0, kind: input, shape index: {}]
  %s1 = inlined_call_operand.hbm [shape: f32[1000,128], index: 1, kind: input, shape index: {}]
  %s2 = inlined_call_operand.vmem [shape: f32[1,128], index: 2, kind: input, shape index: {}]
  %s3 = inlined_call_operand.hbm [shape: f32[8,128], index: 3, kind: output, shape index: {}]
  %s4 = sld [smem:[#allocation0]]
  $region30: #{tpu_custom_call.1} parent=0
    _
  %s6 = ssub.s32 1, %s4
  %s7 = scalar_select 0, %s6, %s4
  $region1: #{tpu_custom_call.1} parent=0
    #allocation2 [shape = 'u8[32768]{0}', space=vmem, size = 0x8000, scoped, tag = 'input window, operand 0, single buffered']
    #allocation3 [shape = 's32[1]{0}', space=sflag, size = 0x4, scoped, tag = 'scoped memory for tpu_custom_call.1']
    #allocation4 [shape = 's32[1]{0}', space=sflag, size = 0x4, scoped, tag = 'scoped memory for tpu_custom_call.1']
    #allocation5 [shape = 'u8[512000]{0}', space=vmem, size = 0x7d000, scoped, tag = 'input window, operand 1, single buffered']
    #allocation6 [shape = 's32[1]{0}', space=sflag, size = 0x4, scoped, tag = 'scoped memory for tpu_custom_call.1']
    #allocation7 [shape = 'u8[4096]{0}', space=vmem, size = 0x1000, scoped, tag = 'output window, operand 0, single buffered']
    %8 = vsyncpa [#allocation3], 0
    %9 = vsyncpa [#allocation6], 0
    %10 = vsyncpa [#allocation4], 0
    // Predicated region
    $region2: #{tpu_custom_call.1} parent=1 // pred_check
      _
    $region3: #{tpu_custom_call.1} parent=1 // pred_check_branch
      %12 = sbr.rel (0) target = $region5
    $region4: #{tpu_custom_call.1} parent=1 // pred_region
      %s14 = ssub.s32 1024, 1024
      %15 = vsyncadd [#allocation3], %s14
      %s17 = sshll.u32 [#allocation2], 4
      %s18 = int_to_ptr.vmem [resolvable:$true] %s17
      %20 = dma.hbm_to_vmem [thread:$0]  %s0, 1024, %s18, [#allocation3]
    $region5: #{tpu_custom_call.1} parent=1 // pred_fallthru
      _
    // Predicated region
    $region6: #{tpu_custom_call.1} parent=1 // pred_check
      _
    $region7: #{tpu_custom_call.1} parent=1 // pred_check_branch
      %22 = sbr.rel (0) target = $region9
    $region8: #{tpu_custom_call.1} parent=1 // pred_region
      %s24 = ssub.s32 16000, 16000
      %25 = vsyncadd [#allocation6], %s24
      %s26 = sshll.u32 [#allocation5], 4
      %s27 = int_to_ptr.vmem [resolvable:$true] %s26
      %32 = dma.hbm_to_vmem [thread:$0]  %s1, 16000, %s27, [#allocation6], 128, 128, 8
    $region9: #{tpu_custom_call.1} parent=1 // pred_fallthru
      _
    // Predicated region
    $region10: #{tpu_custom_call.1} parent=1 // pred_check
      _
    $region11: #{tpu_custom_call.1} parent=1 // pred_check_branch
      %34 = sbr.rel (0) target = $region13
    $region12: #{tpu_custom_call.1} parent=1 // pred_region
      _
    $region13: #{tpu_custom_call.1} parent=1 // pred_fallthru
      _
    // Predicated region
    $region14: #{tpu_custom_call.1} parent=1 // pred_check
      _
    $region15: #{tpu_custom_call.1} parent=1 // pred_check_branch
      %36 = sbr.rel (0) target = $region17
    $region16: #{tpu_custom_call.1} parent=1 // pred_region
      %37 = dma.done [#allocation3], 1024
    $region17: #{tpu_custom_call.1} parent=1 // pred_fallthru
      _
    // Predicated region
    $region18: #{tpu_custom_call.1} parent=1 // pred_check
      _
    $region19: #{tpu_custom_call.1} parent=1 // pred_check_branch
      %39 = sbr.rel (0) target = $region21
    $region20: #{tpu_custom_call.1} parent=1 // pred_region
      %40 = dma.done [#allocation6], 16000
    $region21: #{tpu_custom_call.1} parent=1 // pred_fallthru
      _
    %v41 = vld [vmem:[#allocation2] sm:$0xff]
    %v42 = vld [vmem:[#allocation2 + $0x8] sm:$0xff]
    %v43 = vld [vmem:[#allocation2 + $0x10] sm:$0xff]
    %v44 = vld [vmem:[#allocation2 + $0x18] sm:$0xff]
    %v45 = vld [vmem:[#allocation2 + $0x20] sm:$0xff]
    %v46 = vld [vmem:[#allocation2 + $0x28] sm:$0xff]
    %v47 = vld [vmem:[#allocation2 + $0x30] sm:$0xff]
    %v48 = vld [vmem:[#allocation2 + $0x38] sm:$0xff]
    %v49 = vld [vmem:[#allocation5] sm:$0xff]
    %v50 = vld [vmem:[#allocation5 + $0x8] sm:$0xff]
    %v51 = vld [vmem:[#allocation5 + $0x10] sm:$0xff]
    %v52 = vld [vmem:[#allocation5 + $0x18] sm:$0xff]
    %v53 = vld [vmem:[#allocation5 + $0x20] sm:$0xff]
    %v54 = vld [vmem:[#allocation5 + $0x28] sm:$0xff]
    %v55 = vld [vmem:[#allocation5 + $0x30] sm:$0xff]
    %v56 = vld [vmem:[#allocation5 + $0x38] sm:$0xff]
    %v57 = vld [vmem:[#allocation5 + $0x40] sm:$0xff]
    %v58 = vld [vmem:[#allocation5 + $0x48] sm:$0xff]
    %v59 = vld [vmem:[#allocation5 + $0x50] sm:$0xff]
    %v60 = vld [vmem:[#allocation5 + $0x58] sm:$0xff]
    %v61 = vld [vmem:[#allocation5 + $0x60] sm:$0xff]
    %v62 = vld [vmem:[#allocation5 + $0x68] sm:$0xff]
    %v63 = vld [vmem:[#allocation5 + $0x70] sm:$0xff]
    %v64 = vld [vmem:[#allocation5 + $0x78] sm:$0xff]
    %v65 = vld [vmem:[#allocation5 + $0x80] sm:$0xff]
    %v66 = vld [vmem:[#allocation5 + $0x88] sm:$0xff]
    %v67 = vld [vmem:[#allocation5 + $0x90] sm:$0xff]
    %v68 = vld [vmem:[#allocation5 + $0x98] sm:$0xff]
    %v69 = vld [vmem:[#allocation5 + $0xa0] sm:$0xff]
    %v70 = vld [vmem:[#allocation5 + $0xa8] sm:$0xff]
    %v71 = vld [vmem:[#allocation5 + $0xb0] sm:$0xff]
    %v72 = vld [vmem:[#allocation5 + $0xb8] sm:$0xff]
    %v73 = vld [vmem:[#allocation5 + $0xc0] sm:$0xff]
    %v74 = vld [vmem:[#allocation5 + $0xc8] sm:$0xff]
    %v75 = vld [vmem:[#allocation5 + $0xd0] sm:$0xff]
    %v76 = vld [vmem:[#allocation5 + $0xd8] sm:$0xff]
    %v77 = vld [vmem:[#allocation5 + $0xe0] sm:$0xff]
    %v78 = vld [vmem:[#allocation5 + $0xe8] sm:$0xff]
    %v79 = vld [vmem:[#allocation5 + $0xf0] sm:$0xff]
    %v80 = vld [vmem:[#allocation5 + $0xf8] sm:$0xff]
    %v81 = vld [vmem:[#allocation5 + $0x100] sm:$0xff]
    %v82 = vld [vmem:[#allocation5 + $0x108] sm:$0xff]
    %v83 = vld [vmem:[#allocation5 + $0x110] sm:$0xff]
    %v84 = vld [vmem:[#allocation5 + $0x118] sm:$0xff]
    %v85 = vld [vmem:[#allocation5 + $0x120] sm:$0xff]
    %v86 = vld [vmem:[#allocation5 + $0x128] sm:$0xff]
    %v87 = vld [vmem:[#allocation5 + $0x130] sm:$0xff]
    %v88 = vld [vmem:[#allocation5 + $0x138] sm:$0xff]
    %v89 = vld [vmem:[#allocation5 + $0x140] sm:$0xff]
    %v90 = vld [vmem:[#allocation5 + $0x148] sm:$0xff]
    %v91 = vld [vmem:[#allocation5 + $0x150] sm:$0xff]
    %v92 = vld [vmem:[#allocation5 + $0x158] sm:$0xff]
    %v93 = vld [vmem:[#allocation5 + $0x160] sm:$0xff]
    %v94 = vld [vmem:[#allocation5 + $0x168] sm:$0xff]
    %v95 = vld [vmem:[#allocation5 + $0x170] sm:$0xff]
    %v96 = vld [vmem:[#allocation5 + $0x178] sm:$0xff]
    %v97 = vld [vmem:[#allocation5 + $0x180] sm:$0xff]
    %v98 = vld [vmem:[#allocation5 + $0x188] sm:$0xff]
    %v99 = vld [vmem:[#allocation5 + $0x190] sm:$0xff]
    %v100 = vld [vmem:[#allocation5 + $0x198] sm:$0xff]
    %v101 = vld [vmem:[#allocation5 + $0x1a0] sm:$0xff]
    %v102 = vld [vmem:[#allocation5 + $0x1a8] sm:$0xff]
    %v103 = vld [vmem:[#allocation5 + $0x1b0] sm:$0xff]
    %v104 = vld [vmem:[#allocation5 + $0x1b8] sm:$0xff]
    %v105 = vld [vmem:[#allocation5 + $0x1c0] sm:$0xff]
    %v106 = vld [vmem:[#allocation5 + $0x1c8] sm:$0xff]
    %v107 = vld [vmem:[#allocation5 + $0x1d0] sm:$0xff]
    %v108 = vld [vmem:[#allocation5 + $0x1d8] sm:$0xff]
    %v109 = vld [vmem:[#allocation5 + $0x1e0] sm:$0xff]
    %v110 = vld [vmem:[#allocation5 + $0x1e8] sm:$0xff]
    %v111 = vld [vmem:[#allocation5 + $0x1f0] sm:$0xff]
    %v112 = vld [vmem:[#allocation5 + $0x1f8] sm:$0xff]
    %v113 = vld [vmem:[#allocation5 + $0x200] sm:$0xff]
    %v114 = vld [vmem:[#allocation5 + $0x208] sm:$0xff]
    %v115 = vld [vmem:[#allocation5 + $0x210] sm:$0xff]
    %v116 = vld [vmem:[#allocation5 + $0x218] sm:$0xff]
    %v117 = vld [vmem:[#allocation5 + $0x220] sm:$0xff]
    %v118 = vld [vmem:[#allocation5 + $0x228] sm:$0xff]
    %v119 = vld [vmem:[#allocation5 + $0x230] sm:$0xff]
    %v120 = vld [vmem:[#allocation5 + $0x238] sm:$0xff]
    %v121 = vld [vmem:[#allocation5 + $0x240] sm:$0xff]
    %v122 = vld [vmem:[#allocation5 + $0x248] sm:$0xff]
    %v123 = vld [vmem:[#allocation5 + $0x250] sm:$0xff]
    %v124 = vld [vmem:[#allocation5 + $0x258] sm:$0xff]
    %v125 = vld [vmem:[#allocation5 + $0x260] sm:$0xff]
    %v126 = vld [vmem:[#allocation5 + $0x268] sm:$0xff]
    %v127 = vld [vmem:[#allocation5 + $0x270] sm:$0xff]
    %v128 = vld [vmem:[#allocation5 + $0x278] sm:$0xff]
    %v129 = vld [vmem:[#allocation5 + $0x280] sm:$0xff]
    %v130 = vld [vmem:[#allocation5 + $0x288] sm:$0xff]
    %v131 = vld [vmem:[#allocation5 + $0x290] sm:$0xff]
    %v132 = vld [vmem:[#allocation5 + $0x298] sm:$0xff]
    %v133 = vld [vmem:[#allocation5 + $0x2a0] sm:$0xff]
    %v134 = vld [vmem:[#allocation5 + $0x2a8] sm:$0xff]
    %v135 = vld [vmem:[#allocation5 + $0x2b0] sm:$0xff]
    %v136 = vld [vmem:[#allocation5 + $0x2b8] sm:$0xff]
    %v137 = vld [vmem:[#allocation5 + $0x2c0] sm:$0xff]
    %v138 = vld [vmem:[#allocation5 + $0x2c8] sm:$0xff]
    %v139 = vld [vmem:[#allocation5 + $0x2d0] sm:$0xff]
    %v140 = vld [vmem:[#allocation5 + $0x2d8] sm:$0xff]
    %v141 = vld [vmem:[#allocation5 + $0x2e0] sm:$0xff]
    %v142 = vld [vmem:[#allocation5 + $0x2e8] sm:$0xff]
    %v143 = vld [vmem:[#allocation5 + $0x2f0] sm:$0xff]
    %v144 = vld [vmem:[#allocation5 + $0x2f8] sm:$0xff]
    %v145 = vld [vmem:[#allocation5 + $0x300] sm:$0xff]
    %v146 = vld [vmem:[#allocation5 + $0x308] sm:$0xff]
    %v147 = vld [vmem:[#allocation5 + $0x310] sm:$0xff]
    %v148 = vld [vmem:[#allocation5 + $0x318] sm:$0xff]
    %v149 = vld [vmem:[#allocation5 + $0x320] sm:$0xff]
    %v150 = vld [vmem:[#allocation5 + $0x328] sm:$0xff]
    %v151 = vld [vmem:[#allocation5 + $0x330] sm:$0xff]
    %v152 = vld [vmem:[#allocation5 + $0x338] sm:$0xff]
    %v153 = vld [vmem:[#allocation5 + $0x340] sm:$0xff]
    %v154 = vld [vmem:[#allocation5 + $0x348] sm:$0xff]
    %v155 = vld [vmem:[#allocation5 + $0x350] sm:$0xff]
    %v156 = vld [vmem:[#allocation5 + $0x358] sm:$0xff]
    %v157 = vld [vmem:[#allocation5 + $0x360] sm:$0xff]
    %v158 = vld [vmem:[#allocation5 + $0x368] sm:$0xff]
    %v159 = vld [vmem:[#allocation5 + $0x370] sm:$0xff]
    %v160 = vld [vmem:[#allocation5 + $0x378] sm:$0xff]
    %v161 = vld [vmem:[#allocation5 + $0x380] sm:$0xff]
    %v162 = vld [vmem:[#allocation5 + $0x388] sm:$0xff]
    %v163 = vld [vmem:[#allocation5 + $0x390] sm:$0xff]
    %v164 = vld [vmem:[#allocation5 + $0x398] sm:$0xff]
    %v165 = vld [vmem:[#allocation5 + $0x3a0] sm:$0xff]
    %v166 = vld [vmem:[#allocation5 + $0x3a8] sm:$0xff]
    %v167 = vld [vmem:[#allocation5 + $0x3b0] sm:$0xff]
    %v168 = vld [vmem:[#allocation5 + $0x3b8] sm:$0xff]
    %v169 = vld [vmem:[#allocation5 + $0x3c0] sm:$0xff]
    %v170 = vld [vmem:[#allocation5 + $0x3c8] sm:$0xff]
    %v171 = vld [vmem:[#allocation5 + $0x3d0] sm:$0xff]
    %v172 = vld [vmem:[#allocation5 + $0x3d8] sm:$0xff]
    %v173 = vld [vmem:[#allocation5 + $0x3e0] sm:$0xff]
    %v174 = vld [vmem:[%s2] sm:$0x1]
    %v176 = vlaneseq
    %v177 = vshrl.u32 %v176, 7
    %v178 = vsub.s32 0, %v177
    %v179 = vrot.slane %v174, %v178
    %vm181 = vcmask 850944
    %v183 = vsel %vm181, %v48, 0
    %185 = vmatprep.subr.mxu0 0.0
    %186 = vmatpush1.msra.mxu0 %v64
    %187 = vmatprep.subr.mxu0 0.0
    %188 = vmatpush1.msra.mxu0 %v63
    %189 = vmatprep.subr.mxu0 0.0
    %190 = vmatpush1.msra.mxu0 %v62
    %191 = vmatprep.subr.mxu0 0.0
    %192 = vmatpush1.msra.mxu0 %v61
    %193 = vmatprep.subr.mxu0 0.0
    %194 = vmatpush1.msra.mxu0 %v60
    %195 = vmatprep.subr.mxu0 0.0
    %196 = vmatpush1.msra.mxu0 %v59
    %197 = vmatprep.subr.mxu0 0.0
    %198 = vmatpush1.msra.mxu0 %v58
    %199 = vmatprep.subr.mxu0 0.0
    %200 = vmatpush1.msra.mxu0 %v57
    %201 = vmatprep.subr.mxu0 0.0
    %202 = vmatpush1.msra.mxu0 %v56
    %203 = vmatprep.subr.mxu0 0.0
    %204 = vmatpush1.msra.mxu0 %v55
    %205 = vmatprep.subr.mxu0 0.0
    %206 = vmatpush1.msra.mxu0 %v54
    %207 = vmatprep.subr.mxu0 0.0
    %208 = vmatpush1.msra.mxu0 %v53
    %209 = vmatprep.subr.mxu0 0.0
    %210 = vmatpush1.msra.mxu0 %v52
    %211 = vmatprep.subr.mxu0 0.0
    %212 = vmatpush1.msra.mxu0 %v51
    %213 = vmatprep.subr.mxu0 0.0
    %214 = vmatpush1.msra.mxu0 %v50
    %215 = vmatprep.subr.mxu0 0.0
    %216 = vmatpush1.msra.mxu0 %v49
    %217 = vmatprep.subr.mxu0 0.0
    %218 = vmatpush2.msra.mxu0 %v80
    %219 = vmatprep.subr.mxu0 0.0
    %220 = vmatpush2.msra.mxu0 %v79
    %221 = vmatprep.subr.mxu0 0.0
    %222 = vmatpush2.msra.mxu0 %v78
    %223 = vmatprep.subr.mxu0 0.0
    %224 = vmatpush2.msra.mxu0 %v77
    %225 = vmatprep.subr.mxu0 0.0
    %226 = vmatpush2.msra.mxu0 %v76
    %227 = vmatprep.subr.mxu0 0.0
    %228 = vmatpush2.msra.mxu0 %v75
    %229 = vmatprep.subr.mxu0 0.0
    %230 = vmatpush2.msra.mxu0 %v74
    %231 = vmatprep.subr.mxu0 0.0
    %232 = vmatpush2.msra.mxu0 %v73
    %233 = vmatprep.subr.mxu0 0.0
    %234 = vmatpush2.msra.mxu0 %v72
    %235 = vmatprep.subr.mxu0 0.0
    %236 = vmatpush2.msra.mxu0 %v71
    %237 = vmatprep.subr.mxu0 0.0
    %238 = vmatpush2.msra.mxu0 %v70
    %239 = vmatprep.subr.mxu0 0.0
    %240 = vmatpush2.msra.mxu0 %v69
    %241 = vmatprep.subr.mxu0 0.0
    %242 = vmatpush2.msra.mxu0 %v68
    %243 = vmatprep.subr.mxu0 0.0
    %244 = vmatpush2.msra.mxu0 %v67
    %245 = vmatprep.subr.mxu0 0.0
    %246 = vmatpush2.msra.mxu0 %v66
    %247 = vmatprep.subr.mxu0 0.0
    %248 = vmatpush2.msra.mxu0 %v65
    %249 = vmatprep.mubr.f32.mxu0 %v42
    %250 = vmatmul.mubr.f32.gmra.mxu0 %v41
    %v251 = vpop.f32.mrf.mxu0
    %v252 = vadd.f32 %v179, %v251
    %v253 = vpop.f32.mrf.mxu0
    %254 = vdwg.mxu0
    %255 = vmatprep.subr.mxu0 0.0
    %256 = vmatpush1.msra.mxu0 %v96
    %257 = vmatprep.subr.mxu0 0.0
    %258 = vmatpush1.msra.mxu0 %v95
    %259 = vmatprep.subr.mxu0 0.0
    %260 = vmatpush1.msra.mxu0 %v94
    %261 = vmatprep.subr.mxu0 0.0
    %262 = vmatpush1.msra.mxu0 %v93
    %263 = vmatprep.subr.mxu0 0.0
    %264 = vmatpush1.msra.mxu0 %v92
    %265 = vmatprep.subr.mxu0 0.0
    %266 = vmatpush1.msra.mxu0 %v91
    %267 = vmatprep.subr.mxu0 0.0
    %268 = vmatpush1.msra.mxu0 %v90
    %269 = vmatprep.subr.mxu0 0.0
    %270 = vmatpush1.msra.mxu0 %v89
    %271 = vmatprep.subr.mxu0 0.0
    %272 = vmatpush1.msra.mxu0 %v88
    %273 = vmatprep.subr.mxu0 0.0
    %274 = vmatpush1.msra.mxu0 %v87
    %275 = vmatprep.subr.mxu0 0.0
    %276 = vmatpush1.msra.mxu0 %v86
    %277 = vmatprep.subr.mxu0 0.0
    %278 = vmatpush1.msra.mxu0 %v85
    %279 = vmatprep.subr.mxu0 0.0
    %280 = vmatpush1.msra.mxu0 %v84
    %281 = vmatprep.subr.mxu0 0.0
    %282 = vmatpush1.msra.mxu0 %v83
    %283 = vmatprep.subr.mxu0 0.0
    %284 = vmatpush1.msra.mxu0 %v82
    %285 = vmatprep.subr.mxu0 0.0
    %286 = vmatpush1.msra.mxu0 %v81
    %287 = vmatprep.subr.mxu0 0.0
    %288 = vmatpush2.msra.mxu0 %v112
    %289 = vmatprep.subr.mxu0 0.0
    %290 = vmatpush2.msra.mxu0 %v111
    %291 = vmatprep.subr.mxu0 0.0
    %292 = vmatpush2.msra.mxu0 %v110
    %293 = vmatprep.subr.mxu0 0.0
    %294 = vmatpush2.msra.mxu0 %v109
    %295 = vmatprep.subr.mxu0 0.0
    %296 = vmatpush2.msra.mxu0 %v108
    %297 = vmatprep.subr.mxu0 0.0
    %298 = vmatpush2.msra.mxu0 %v107
    %299 = vmatprep.subr.mxu0 0.0
    %300 = vmatpush2.msra.mxu0 %v106
    %301 = vmatprep.subr.mxu0 0.0
    %302 = vmatpush2.msra.mxu0 %v105
    %303 = vmatprep.subr.mxu0 0.0
    %304 = vmatpush2.msra.mxu0 %v104
    %305 = vmatprep.subr.mxu0 0.0
    %306 = vmatpush2.msra.mxu0 %v103
    %307 = vmatprep.subr.mxu0 0.0
    %308 = vmatpush2.msra.mxu0 %v102
    %309 = vmatprep.subr.mxu0 0.0
    %310 = vmatpush2.msra.mxu0 %v101
    %311 = vmatprep.subr.mxu0 0.0
    %312 = vmatpush2.msra.mxu0 %v100
    %313 = vmatprep.subr.mxu0 0.0
    %314 = vmatpush2.msra.mxu0 %v99
    %315 = vmatprep.subr.mxu0 0.0
    %316 = vmatpush2.msra.mxu0 %v98
    %317 = vmatprep.subr.mxu0 0.0
    %318 = vmatpush2.msra.mxu0 %v97
    %319 = vmatprep.mubr.f32.mxu0 %v44
    %320 = vmatmul.mubr.f32.gmra.mxu0 %v43
    %v321 = vpop.f32.mrf.mxu0
    %v322 = vadd.f32 %v252, %v321
    %v323 = vpop.f32.mrf.mxu0
    %324 = vdwg.mxu0
    %325 = vmatprep.subr.mxu0 0.0
    %326 = vmatpush1.msra.mxu0 %v128
    %327 = vmatprep.subr.mxu0 0.0
    %328 = vmatpush1.msra.mxu0 %v127
    %329 = vmatprep.subr.mxu0 0.0
    %330 = vmatpush1.msra.mxu0 %v126
    %331 = vmatprep.subr.mxu0 0.0
    %332 = vmatpush1.msra.mxu0 %v125
    %333 = vmatprep.subr.mxu0 0.0
    %334 = vmatpush1.msra.mxu0 %v124
    %335 = vmatprep.subr.mxu0 0.0
    %336 = vmatpush1.msra.mxu0 %v123
    %337 = vmatprep.subr.mxu0 0.0
    %338 = vmatpush1.msra.mxu0 %v122
    %339 = vmatprep.subr.mxu0 0.0
    %340 = vmatpush1.msra.mxu0 %v121
    %341 = vmatprep.subr.mxu0 0.0
    %342 = vmatpush1.msra.mxu0 %v120
    %343 = vmatprep.subr.mxu0 0.0
    %344 = vmatpush1.msra.mxu0 %v119
    %345 = vmatprep.subr.mxu0 0.0
    %346 = vmatpush1.msra.mxu0 %v118
    %347 = vmatprep.subr.mxu0 0.0
    %348 = vmatpush1.msra.mxu0 %v117
    %349 = vmatprep.subr.mxu0 0.0
    %350 = vmatpush1.msra.mxu0 %v116
    %351 = vmatprep.subr.mxu0 0.0
    %352 = vmatpush1.msra.mxu0 %v115
    %353 = vmatprep.subr.mxu0 0.0
    %354 = vmatpush1.msra.mxu0 %v114
    %355 = vmatprep.subr.mxu0 0.0
    %356 = vmatpush1.msra.mxu0 %v113
    %357 = vmatprep.subr.mxu0 0.0
    %358 = vmatpush2.msra.mxu0 %v144
    %359 = vmatprep.subr.mxu0 0.0
    %360 = vmatpush2.msra.mxu0 %v143
    %361 = vmatprep.subr.mxu0 0.0
    %362 = vmatpush2.msra.mxu0 %v142
    %363 = vmatprep.subr.mxu0 0.0
    %364 = vmatpush2.msra.mxu0 %v141
    %365 = vmatprep.subr.mxu0 0.0
    %366 = vmatpush2.msra.mxu0 %v140
    %367 = vmatprep.subr.mxu0 0.0
    %368 = vmatpush2.msra.mxu0 %v139
    %369 = vmatprep.subr.mxu0 0.0
    %370 = vmatpush2.msra.mxu0 %v138
    %371 = vmatprep.subr.mxu0 0.0
    %372 = vmatpush2.msra.mxu0 %v137
    %373 = vmatprep.subr.mxu0 0.0
    %374 = vmatpush2.msra.mxu0 %v136
    %375 = vmatprep.subr.mxu0 0.0
    %376 = vmatpush2.msra.mxu0 %v135
    %377 = vmatprep.subr.mxu0 0.0
    %378 = vmatpush2.msra.mxu0 %v134
    %379 = vmatprep.subr.mxu0 0.0
    %380 = vmatpush2.msra.mxu0 %v133
    %381 = vmatprep.subr.mxu0 0.0
    %382 = vmatpush2.msra.mxu0 %v132
    %383 = vmatprep.subr.mxu0 0.0
    %384 = vmatpush2.msra.mxu0 %v131
    %385 = vmatprep.subr.mxu0 0.0
    %386 = vmatpush2.msra.mxu0 %v130
    %387 = vmatprep.subr.mxu0 0.0
    %388 = vmatpush2.msra.mxu0 %v129
    %389 = vmatprep.mubr.f32.mxu0 %v46
    %390 = vmatmul.mubr.f32.gmra.mxu0 %v45
    %v391 = vpop.f32.mrf.mxu0
    %v392 = vadd.f32 %v322, %v391
    %v393 = vpop.f32.mrf.mxu0
    %394 = vdwg.mxu0
    %395 = vmatprep.subr.mxu0 0.0
    %396 = vmatpush1.msra.mxu0 %v160
    %397 = vmatprep.subr.mxu0 0.0
    %398 = vmatpush1.msra.mxu0 %v159
    %399 = vmatprep.subr.mxu0 0.0
    %400 = vmatpush1.msra.mxu0 %v158
    %401 = vmatprep.subr.mxu0 0.0
    %402 = vmatpush1.msra.mxu0 %v157
    %403 = vmatprep.subr.mxu0 0.0
    %404 = vmatpush1.msra.mxu0 %v156
    %405 = vmatprep.subr.mxu0 0.0
    %406 = vmatpush1.msra.mxu0 %v155
    %407 = vmatprep.subr.mxu0 0.0
    %408 = vmatpush1.msra.mxu0 %v154
    %409 = vmatprep.subr.mxu0 0.0
    %410 = vmatpush1.msra.mxu0 %v153
    %411 = vmatprep.subr.mxu0 0.0
    %412 = vmatpush1.msra.mxu0 %v152
    %413 = vmatprep.subr.mxu0 0.0
    %414 = vmatpush1.msra.mxu0 %v151
    %415 = vmatprep.subr.mxu0 0.0
    %416 = vmatpush1.msra.mxu0 %v150
    %417 = vmatprep.subr.mxu0 0.0
    %418 = vmatpush1.msra.mxu0 %v149
    %419 = vmatprep.subr.mxu0 0.0
    %420 = vmatpush1.msra.mxu0 %v148
    %421 = vmatprep.subr.mxu0 0.0
    %422 = vmatpush1.msra.mxu0 %v147
    %423 = vmatprep.subr.mxu0 0.0
    %424 = vmatpush1.msra.mxu0 %v146
    %425 = vmatprep.subr.mxu0 0.0
    %426 = vmatpush1.msra.mxu0 %v145
    %427 = vmatprep.subr.mxu0 0.0
    %428 = vmatpush2.msra.mxu0 0.0
    %429 = vmatprep.subr.mxu0 0.0
    %430 = vmatpush2.msra.mxu0 0.0
    %431 = vmatprep.subr.mxu0 0.0
    %432 = vmatpush2.msra.mxu0 0.0
    %433 = vmatprep.subr.mxu0 0.0
    %434 = vmatpush2.msra.mxu0 %v173
    %435 = vmatprep.subr.mxu0 0.0
    %436 = vmatpush2.msra.mxu0 %v172
    %437 = vmatprep.subr.mxu0 0.0
    %438 = vmatpush2.msra.mxu0 %v171
    %439 = vmatprep.subr.mxu0 0.0
    %440 = vmatpush2.msra.mxu0 %v170
    %441 = vmatprep.subr.mxu0 0.0
    %442 = vmatpush2.msra.mxu0 %v169
    %443 = vmatprep.subr.mxu0 0.0
    %444 = vmatpush2.msra.mxu0 %v168
    %445 = vmatprep.subr.mxu0 0.0
    %446 = vmatpush2.msra.mxu0 %v167
    %447 = vmatprep.subr.mxu0 0.0
    %448 = vmatpush2.msra.mxu0 %v166
    %449 = vmatprep.subr.mxu0 0.0
    %450 = vmatpush2.msra.mxu0 %v165
    %451 = vmatprep.subr.mxu0 0.0
    %452 = vmatpush2.msra.mxu0 %v164
    %453 = vmatprep.subr.mxu0 0.0
    %454 = vmatpush2.msra.mxu0 %v163
    %455 = vmatprep.subr.mxu0 0.0
    %456 = vmatpush2.msra.mxu0 %v162
    %457 = vmatprep.subr.mxu0 0.0
    %458 = vmatpush2.msra.mxu0 %v161
    %459 = vmatprep.mubr.f32.mxu0 %v183
    %460 = vmatmul.mubr.f32.gmra.mxu0 %v47
    %v461 = vpop.f32.mrf.mxu0
    %v462 = vadd.f32 %v392, %v461
    %v463 = vpop.f32.mrf.mxu0
    %464 = vdwg.mxu0
    %465 = vmax.xlane.f32.xlu0 %v462
    %v466 = vpop.xlane.xlu0 %465
    %v467 = vsub.f32 %v462, %v466
    %v468 = vmul.f32 %v467, 1.442695
    %v469 = vpow.pop %v468
    %470 = vadd.xlane.f32.xlu0 %v469
    %v471 = vpop.xlane.xlu0 %470
    %v472 = vlog2.pop %v471
    %v473 = vmul.f32 %v472, 0.6931472
    %v474 = vsub.f32 %v467, %v473
    %475 = vst [vmem:[#allocation7] sm:$0xff] %v474
    // Predicated region
    $region22: #{tpu_custom_call.1} parent=1 // pred_check
      _
    $region23: #{tpu_custom_call.1} parent=1 // pred_check_branch
      %477 = sbr.rel (0) target = $region25
    $region24: #{tpu_custom_call.1} parent=1 // pred_region
      %s479 = ssub.s32 128, 128
      %480 = vsyncadd [#allocation4], %s479
      %s482 = sshll.u32 [#allocation7], 4
      %s483 = int_to_ptr.vmem [resolvable:$true] %s482
      %485 = dma.vmem_to_hbm [thread:$0]  %s483, 128, %s3, [#allocation4]
    $region25: #{tpu_custom_call.1} parent=1 // pred_fallthru
      _
    // Predicated region
    $region26: #{tpu_custom_call.1} parent=1 // pred_check
      _
    $region27: #{tpu_custom_call.1} parent=1 // pred_check_branch
      %487 = sbr.rel (0) target = $region29
    $region28: #{tpu_custom_call.1} parent=1 // pred_region
      %488 = dma.done [#allocation4], 128
    $region29: #{tpu_custom_call.1} parent=1 // pred_fallthru
      _
    %489 = vsyncpa [#allocation3], 1
    %490 = vsyncpa [#allocation6], 1
    %491 = vsyncpa [#allocation4], 1

</llo_original>
